<compile_context>
chip_gen: v5e
topology: v5e:2x2
jax: 0.10.0
libtpu: 0.0.40
codegen_flags: <defaults>
</compile_context>

<pallas_src>
import jax
import jax.numpy as jnp
from jax.experimental import pallas as pl
from jax.experimental.pallas import tpu as pltpu

IMAGENET_DEFAULT_MEAN = (0.485, 0.456, 0.406)   # cancels out of the folded label math
IMAGENET_DEFAULT_STD = (0.229, 0.224, 0.225)
PATCH = 16


# ---------------------------------------------------------------------------
# Fused kernel: label normalization + patch-embed + reconstruction + masked SSE
# ---------------------------------------------------------------------------
def _make_fused_kernel(tm, total_rows, n_channels, pix, std):
    """Build the fused kernel with all scalars baked in as compile-time constants.

    Per grid step it consumes one (tm, C*pix) bf16 tile of patch rows (channel-major
    within the patch), runs the two MXU matmuls of the MAE stand-in, computes the
    normalized labels for the same tile entirely in registers/VMEM, and writes the
    tile's mask-weighted sum of squared errors into its own lane-dense (1, 128)
    output block (no cross-tile carried state -> fully parallel grid).
    """
    inv_pix = 1.0 / float(pix)
    inv_nm1 = 1.0 / float(pix - 1)

    def kernel(x_ref, mask_ref, we_ref, be_ref, wd_ref, bd_ref, o_ref):
        step = pl.program_id(0)
        x16 = x_ref[...]                                      # (tm, C*pix) bf16

        # Row validity (ragged last tile) AND masked-patch predicate, (tm, 1).
        rows = step * tm + jax.lax.broadcasted_iota(jnp.int32, (tm, 1), 0)
        keep = (rows < total_rows) & (mask_ref[...] > 0.5)

        # ---- MAE stand-in: patch embed -> reconstruction head (bf16 MXU, f32 acc).
        emb = jnp.dot(x16, we_ref[...],
                      preferred_element_type=jnp.float32) + be_ref[...]
        rec = jnp.dot(emb.astype(jnp.bfloat16), wd_ref[...],
                      preferred_element_type=jnp.float32) + bd_ref[...]

        # ---- labels (torch no_grad block) + squared error, one lane-dense 256-lane
        #      channel slice at a time.  ImageNet un-normalization folded out:
        #        (x*std+mean - mu_u)/(sqrt(var_u)+1e-6) == (x-mu)*std/(std*sqrt(var)+1e-6)
        #      so the per-element x*std+mean is gone and the mean constants cancel.
        # TODO(synk): if a bundle dump shows the XLU/VALU slot binding, move the
        # per-channel sum / sum-of-squares onto the idle MXU via ones-matmuls.
        row_acc = jnp.zeros((tm, 1), jnp.float32)
        for c in range(n_channels):
            sl = slice(c * pix, (c + 1) * pix)
            xs = x16[:, sl].astype(jnp.float32)
            sx = jnp.sum(xs, axis=-1, keepdims=True)
            sxx = jnp.sum(xs * xs, axis=-1, keepdims=True)
            mu = sx * inv_pix
            var = jnp.maximum((sxx - float(pix) * mu * mu) * inv_nm1, 0.0)
            # Approximate EUP reciprocal (free slot); not bit-exact vs. a true divide.
            scale = std[c] * pl.reciprocal(std[c] * jnp.sqrt(var) + 1e-6, approx=True)
            lab = (xs - mu) * scale
            d = rec[:, sl] - lab
            row_acc = row_acc + jnp.sum(d * d, axis=-1, keepdims=True)

        # Select (NOT multiply): padded / OOB rows may carry NaN/Inf garbage.
        row_acc = jnp.where(keep, row_acc, 0.0)
        tile_sum = jnp.sum(row_acc, axis=0, keepdims=True)        # (1, 1)
        o_ref[...] = jnp.broadcast_to(tile_sum, o_ref.shape)      # lane-dense (1, 128)

    return kernel


def masked_mae_sq_partials(patches, mask_col, w_embed, b_embed, w_dec, b_dec, *, tm=1024):
    """patches: (B*N, C*pix) bf16, channel-major within the patch.
    mask_col: (B*N, 1) f32 in {0, 1}.
    Returns (num_tiles, 128) f32; every lane of row i carries tile i's masked
    sum of squared errors (sum lane 0 across rows outside the kernel)."""
    rows, d_in = patches.shape
    enc = w_embed.shape[1]
    pix = PATCH * PATCH
    n_channels = d_in // pix
    tm = min(tm, rows)                       # full-dim block if rows < tm
    num_tiles = pl.cdiv(rows, tm)

    kernel = _make_fused_kernel(
        tm, rows, n_channels, pix,
        tuple(float(s) for s in IMAGENET_DEFAULT_STD))

    return pl.pallas_call(
        kernel,
        out_shape=jax.ShapeDtypeStruct((num_tiles, 128), jnp.float32),
        grid=(num_tiles,),
        in_specs=[
            # bf16 patch rows (pipelined, double-buffered).
            # TODO(synk): for bandwidth-starved v5e, sweep pipeline_mode=pl.Buffered(3)
            # here if the DMA is still exposed after the bf16 switch.
            pl.BlockSpec((tm, d_in), lambda i: (i, 0)),
            # Mask column.  An int8 column would shrink this (already tiny, <0.3% of
            # the stream) side-channel further, but a (tm, 1) i8 block is a layout
            # corner case, so it is kept f32 for robustness.
            pl.BlockSpec((tm, 1), lambda i: (i, 0)),
            pl.BlockSpec((d_in, enc), lambda i: (0, 0)),    # w_embed (resident)
            pl.BlockSpec((1, enc), lambda i: (0, 0)),       # b_embed
            pl.BlockSpec((enc, d_in), lambda i: (0, 0)),    # w_dec (resident)
            pl.BlockSpec((1, d_in), lambda i: (0, 0)),      # b_dec
        ],
        out_specs=pl.BlockSpec((1, 128), lambda i: (i, 0)),  # per-tile partial sums
        compiler_params=pltpu.CompilerParams(
            dimension_semantics=("parallel",),               # independent tiles -> megacore
            vmem_limit_bytes=48 * 1024 * 1024),
    )(patches, mask_col, w_embed, b_embed, w_dec, b_dec)


# ---------------------------------------------------------------------------
# IRRA (Pallas version).  Only the submodules exercised by the returned dict
# of forward() are materialized.
# ---------------------------------------------------------------------------
class IRRAPallas:
    def __init__(self, key, img_size=32, encoder_embed_dim=128, temperature=0.02):
        self.patch_dim = 3 * PATCH * PATCH          # 768
        self.enc_dim = encoder_embed_dim
        k1, k2 = jax.random.split(key)
        # Deterministic synthetic weights for the MAE stand-in (bf16 for the MXU;
        # biases stay f32 so the epilogue is f32 on every chip generation).
        self.w_embed = (0.02 * jax.random.normal(
            k1, (self.patch_dim, self.enc_dim), jnp.float32)).astype(jnp.bfloat16)
        self.b_embed = jnp.zeros((1, self.enc_dim), jnp.float32)
        self.w_dec = (0.02 * jax.random.normal(
            k2, (self.enc_dim, self.patch_dim), jnp.float32)).astype(jnp.bfloat16)
        self.b_dec = jnp.zeros((1, self.patch_dim), jnp.float32)
        self.logit_scale = jnp.float32(1.0 / temperature)
        # TODO(synk): CLIP base_model, TokenGT and the classifier/MLM/cross-attn heads
        # are constructed in the reference __init__ but do not contribute to the
        # returned dict of this forward (i_feats is computed and discarded); not translated.

    def forward(self, batch):
        ret = {}
        images = batch["images"]                                   # (B, 3, H, W) fp16
        mask = batch["image_mask"]                                 # (B, N) bool
        B, C, H, W = images.shape
        nh, nw = H // PATCH, W // PATCH
        N = nh * nw

        # Patchify NCHW -> per-patch rows, channel-major within the patch, in bf16:
        #   'b c (h p1) (w p2) -> (b h w) (c p1 p2)'
        # The fixed '(c p)' vs '(p c)' permutation is absorbed into the synthetic
        # stand-in weights; MSE semantics unchanged.  Emitting bf16 halves both the
        # HBM write of this transpose and the kernel's read traffic vs. f32.
        x = images.astype(jnp.bfloat16).reshape(B, C, nh, PATCH, nw, PATCH)
        patches = x.transpose(0, 2, 4, 1, 3, 5).reshape(B * N, C * PATCH * PATCH)
        mask_col = mask.reshape(B * N, 1).astype(jnp.float32)

        # TODO(synk): the real PretrainVisionTransformer encoder/decoder blocks are
        # replaced by a patch-embed + reconstruction-head stand-in; reconstructing all
        # patches and masking inside the loss is exactly equivalent for this
        # per-patch-independent stand-in (and removes the XLA gathers entirely).
        # TODO(synk): if the masked fraction is small in the real workload, switch to a
        # PrefetchScalarGridSpec row-offset gather so only masked-row tiles are streamed.
        partials = masked_mae_sq_partials(
            patches, mask_col, self.w_embed, self.b_embed, self.w_dec, self.b_dec)

        # Tiny final reduction + mean in XLA (keeps the kernel grid fully parallel).
        # Denominator uses the runtime mask count, so an uneven per-image mask is fine.
        sq_sum = jnp.sum(partials[:, 0])
        masked_elems = jnp.sum(mask_col) * self.patch_dim
        ret["mse_loss"] = sq_sum / masked_elems

        # TODO(synk): image_feats = self.base_model(images) (full CLIP ViT) is run in
        # the reference but its result is not part of the returned dict.

        ret["temperature"] = 1.0 / self.logit_scale
        return ret


if __name__ == "__main__":
    key = jax.random.PRNGKey(0)
    k_img, k_mask, k_model = jax.random.split(key, 3)

    B, C, H, W = 2, 3, 32, 32                 # 2x2 = 4 patches of 16x16
    N = (H // PATCH) * (W // PATCH)
    NUM_MASKED = 2

    images = jax.random.normal(k_img, (B, C, H, W), jnp.float32).astype(jnp.float16)

    # deterministic mask with exactly NUM_MASKED masked patches per image
    scores = jax.random.uniform(k_mask, (B, N))
    m_idx = jnp.argsort(scores, axis=1)[:, :NUM_MASKED]
    image_mask = jnp.zeros((B, N), jnp.bool_).at[jnp.arange(B)[:, None], m_idx].set(True)

    model = IRRAPallas(k_model, img_size=H, encoder_embed_dim=128, temperature=0.02)
    batch = {"images": images, "image_mask": image_mask}

    ret = model.forward(batch)
    jax.block_until_ready(ret["mse_loss"])
    jax.block_until_ready(ret["temperature"])
    assert ret["mse_loss"].shape == ()
    assert bool(jnp.isfinite(ret["mse_loss"]))
    print("KERNEL_OK")
</pallas_src>

<mosaic_0001>
module attributes {stable_mosaic.version = 11 : i64} {
  func.func @kernel(%arg0: i32, %arg1: memref<8x768xbf16, #tpu.memory_space<vmem>>, %arg2: memref<8x1xf32, #tpu.memory_space<vmem>>, %arg3: memref<768x128xbf16, #tpu.memory_space<vmem>>, %arg4: memref<1x128xf32, #tpu.memory_space<vmem>>, %arg5: memref<128x768xbf16, #tpu.memory_space<vmem>>, %arg6: memref<1x768xf32, #tpu.memory_space<vmem>>, %arg7: memref<1x128xf32, #tpu.memory_space<vmem>>) attributes {dimension_semantics = [#tpu.dimension_semantics<parallel>], iteration_bounds = array<i64: 1>, scalar_prefetch = 0 : i64, scratch_operands = 0 : i64, tpu.core_type = #tpu.core_type<tc>, window_params = [{transform_indices = @transform_0, window_bounds = array<i64: 8, 768>}, {transform_indices = @transform_1, window_bounds = array<i64: 8, 1>}, {pipeline_mode = #tpu.pipeline_mode<synchronous>, transform_indices = @transform_2, window_bounds = array<i64: 768, 128>}, {pipeline_mode = #tpu.pipeline_mode<synchronous>, transform_indices = @transform_3, window_bounds = array<i64: 1, 128>}, {pipeline_mode = #tpu.pipeline_mode<synchronous>, transform_indices = @transform_4, window_bounds = array<i64: 128, 768>}, {pipeline_mode = #tpu.pipeline_mode<synchronous>, transform_indices = @transform_5, window_bounds = array<i64: 1, 768>}, {transform_indices = @transform_6, window_bounds = array<i64: 1, 128>}]} {
    %c0 = arith.constant 0 : index
    %c0_0 = arith.constant 0 : index
    %0 = vector.load %arg1[%c0, %c0_0] : memref<8x768xbf16, #tpu.memory_space<vmem>>, vector<8x768xbf16>
    %c8_i32 = arith.constant 8 : i32
    %1 = arith.muli %arg0, %c8_i32 : i32
    %2 = tpu.iota {dimensions = array<i32: 0>} : vector<8x1xi32>
    %3 = vector.broadcast %1 : i32 to vector<8x1xi32>
    %4 = arith.addi %3, %2 : vector<8x1xi32>
    %c8_i32_1 = arith.constant 8 : i32
    %5 = vector.broadcast %c8_i32_1 : i32 to vector<8x1xi32>
    %6 = arith.cmpi slt, %4, %5 : vector<8x1xi32>
    %c0_2 = arith.constant 0 : index
    %c0_3 = arith.constant 0 : index
    %7 = vector.load %arg2[%c0_2, %c0_3] : memref<8x1xf32, #tpu.memory_space<vmem>>, vector<8x1xf32>
    %cst = arith.constant 5.000000e-01 : f32
    %8 = vector.broadcast %cst : f32 to vector<8x1xf32>
    %9 = arith.cmpf ogt, %7, %8 : vector<8x1xf32>
    %10 = arith.andi %6, %9 : vector<8x1xi1>
    %c0_4 = arith.constant 0 : index
    %c0_5 = arith.constant 0 : index
    %11 = vector.load %arg3[%c0_4, %c0_5] : memref<768x128xbf16, #tpu.memory_space<vmem>>, vector<768x128xbf16>
    %cst_6 = arith.constant dense<0.000000e+00> : vector<8x128xf32>
    %12 = tpu.matmul %0, %11, %cst_6 {dimension_numbers = #tpu.dot_dimension_numbers<[1], [0], [0], [1], [0, 0, 1, 1], [], []>} : vector<8x768xbf16>, vector<768x128xbf16>, vector<8x128xf32> -> vector<8x128xf32>
    %c0_7 = arith.constant 0 : index
    %c0_8 = arith.constant 0 : index
    %13 = vector.load %arg4[%c0_7, %c0_8] : memref<1x128xf32, #tpu.memory_space<vmem>>, vector<1x128xf32>
    %14 = vector.broadcast %13 : vector<1x128xf32> to vector<8x128xf32>
    %15 = arith.addf %12, %14 : vector<8x128xf32>
    %16 = arith.truncf %15 : vector<8x128xf32> to vector<8x128xbf16>
    %c0_9 = arith.constant 0 : index
    %c0_10 = arith.constant 0 : index
    %17 = vector.load %arg5[%c0_9, %c0_10] : memref<128x768xbf16, #tpu.memory_space<vmem>>, vector<128x768xbf16>
    %cst_11 = arith.constant dense<0.000000e+00> : vector<8x768xf32>
    %18 = tpu.matmul %16, %17, %cst_11 {dimension_numbers = #tpu.dot_dimension_numbers<[1], [0], [0], [1], [0, 0, 1, 1], [], []>} : vector<8x128xbf16>, vector<128x768xbf16>, vector<8x768xf32> -> vector<8x768xf32>
    %c0_12 = arith.constant 0 : index
    %c0_13 = arith.constant 0 : index
    %19 = vector.load %arg6[%c0_12, %c0_13] : memref<1x768xf32, #tpu.memory_space<vmem>>, vector<1x768xf32>
    %20 = vector.broadcast %19 : vector<1x768xf32> to vector<8x768xf32>
    %21 = arith.addf %18, %20 : vector<8x768xf32>
    %cst_14 = arith.constant 0.000000e+00 : f32
    %22 = vector.broadcast %cst_14 : f32 to vector<8x1xf32>
    %23 = vector.extract_strided_slice %0 {offsets = [0, 0], sizes = [8, 256], strides = [1, 1]} : vector<8x768xbf16> to vector<8x256xbf16>
    %24 = arith.extf %23 : vector<8x256xbf16> to vector<8x256xf32>
    %cst_15 = arith.constant dense<0.000000e+00> : vector<8xf32>
    %25 = vector.multi_reduction <add>, %24, %cst_15 [1] : vector<8x256xf32> to vector<8xf32>
    %26 = vector.shape_cast %25 : vector<8xf32> to vector<8x1xf32>
    %27 = arith.mulf %24, %24 : vector<8x256xf32>
    %cst_16 = arith.constant dense<0.000000e+00> : vector<8xf32>
    %28 = vector.multi_reduction <add>, %27, %cst_16 [1] : vector<8x256xf32> to vector<8xf32>
    %29 = vector.shape_cast %28 : vector<8xf32> to vector<8x1xf32>
    %cst_17 = arith.constant 3.906250e-03 : f32
    %30 = vector.broadcast %cst_17 : f32 to vector<8x1xf32>
    %31 = arith.mulf %26, %30 : vector<8x1xf32>
    %cst_18 = arith.constant 2.560000e+02 : f32
    %32 = vector.broadcast %cst_18 : f32 to vector<8x1xf32>
    %33 = arith.mulf %32, %31 : vector<8x1xf32>
    %34 = arith.mulf %33, %31 : vector<8x1xf32>
    %35 = arith.subf %29, %34 : vector<8x1xf32>
    %cst_19 = arith.constant 0.00392156886 : f32
    %36 = vector.broadcast %cst_19 : f32 to vector<8x1xf32>
    %37 = arith.mulf %35, %36 : vector<8x1xf32>
    %cst_20 = arith.constant 0.000000e+00 : f32
    %38 = vector.broadcast %cst_20 : f32 to vector<8x1xf32>
    %39 = arith.maximumf %37, %38 : vector<8x1xf32>
    %40 = math.sqrt %39 : vector<8x1xf32>
    %cst_21 = arith.constant 2.290000e-01 : f32
    %41 = vector.broadcast %cst_21 : f32 to vector<8x1xf32>
    %42 = arith.mulf %41, %40 : vector<8x1xf32>
    %cst_22 = arith.constant 9.99999997E-7 : f32
    %43 = vector.broadcast %cst_22 : f32 to vector<8x1xf32>
    %44 = arith.addf %42, %43 : vector<8x1xf32>
    %45 = tpu.reciprocal %44 {approx = true} : vector<8x1xf32> -> vector<8x1xf32>
    %cst_23 = arith.constant 2.290000e-01 : f32
    %46 = vector.broadcast %cst_23 : f32 to vector<8x1xf32>
    %47 = arith.mulf %46, %45 : vector<8x1xf32>
    %48 = vector.broadcast %31 : vector<8x1xf32> to vector<8x256xf32>
    %49 = arith.subf %24, %48 : vector<8x256xf32>
    %50 = vector.broadcast %47 : vector<8x1xf32> to vector<8x256xf32>
    %51 = arith.mulf %49, %50 : vector<8x256xf32>
    %52 = vector.extract_strided_slice %21 {offsets = [0, 0], sizes = [8, 256], strides = [1, 1]} : vector<8x768xf32> to vector<8x256xf32>
    %53 = arith.subf %52, %51 : vector<8x256xf32>
    %54 = arith.mulf %53, %53 : vector<8x256xf32>
    %cst_24 = arith.constant dense<0.000000e+00> : vector<8xf32>
    %55 = vector.multi_reduction <add>, %54, %cst_24 [1] : vector<8x256xf32> to vector<8xf32>
    %56 = vector.shape_cast %55 : vector<8xf32> to vector<8x1xf32>
    %57 = arith.addf %22, %56 : vector<8x1xf32>
    %58 = vector.extract_strided_slice %0 {offsets = [0, 256], sizes = [8, 256], strides = [1, 1]} : vector<8x768xbf16> to vector<8x256xbf16>
    %59 = arith.extf %58 : vector<8x256xbf16> to vector<8x256xf32>
    %cst_25 = arith.constant dense<0.000000e+00> : vector<8xf32>
    %60 = vector.multi_reduction <add>, %59, %cst_25 [1] : vector<8x256xf32> to vector<8xf32>
    %61 = vector.shape_cast %60 : vector<8xf32> to vector<8x1xf32>
    %62 = arith.mulf %59, %59 : vector<8x256xf32>
    %cst_26 = arith.constant dense<0.000000e+00> : vector<8xf32>
    %63 = vector.multi_reduction <add>, %62, %cst_26 [1] : vector<8x256xf32> to vector<8xf32>
    %64 = vector.shape_cast %63 : vector<8xf32> to vector<8x1xf32>
    %cst_27 = arith.constant 3.906250e-03 : f32
    %65 = vector.broadcast %cst_27 : f32 to vector<8x1xf32>
    %66 = arith.mulf %61, %65 : vector<8x1xf32>
    %cst_28 = arith.constant 2.560000e+02 : f32
    %67 = vector.broadcast %cst_28 : f32 to vector<8x1xf32>
    %68 = arith.mulf %67, %66 : vector<8x1xf32>
    %69 = arith.mulf %68, %66 : vector<8x1xf32>
    %70 = arith.subf %64, %69 : vector<8x1xf32>
    %cst_29 = arith.constant 0.00392156886 : f32
    %71 = vector.broadcast %cst_29 : f32 to vector<8x1xf32>
    %72 = arith.mulf %70, %71 : vector<8x1xf32>
    %cst_30 = arith.constant 0.000000e+00 : f32
    %73 = vector.broadcast %cst_30 : f32 to vector<8x1xf32>
    %74 = arith.maximumf %72, %73 : vector<8x1xf32>
    %75 = math.sqrt %74 : vector<8x1xf32>
    %cst_31 = arith.constant 2.240000e-01 : f32
    %76 = vector.broadcast %cst_31 : f32 to vector<8x1xf32>
    %77 = arith.mulf %76, %75 : vector<8x1xf32>
    %cst_32 = arith.constant 9.99999997E-7 : f32
    %78 = vector.broadcast %cst_32 : f32 to vector<8x1xf32>
    %79 = arith.addf %77, %78 : vector<8x1xf32>
    %80 = tpu.reciprocal %79 {approx = true} : vector<8x1xf32> -> vector<8x1xf32>
    %cst_33 = arith.constant 2.240000e-01 : f32
    %81 = vector.broadcast %cst_33 : f32 to vector<8x1xf32>
    %82 = arith.mulf %81, %80 : vector<8x1xf32>
    %83 = vector.broadcast %66 : vector<8x1xf32> to vector<8x256xf32>
    %84 = arith.subf %59, %83 : vector<8x256xf32>
    %85 = vector.broadcast %82 : vector<8x1xf32> to vector<8x256xf32>
    %86 = arith.mulf %84, %85 : vector<8x256xf32>
    %87 = vector.extract_strided_slice %21 {offsets = [0, 256], sizes = [8, 256], strides = [1, 1]} : vector<8x768xf32> to vector<8x256xf32>
    %88 = arith.subf %87, %86 : vector<8x256xf32>
    %89 = arith.mulf %88, %88 : vector<8x256xf32>
    %cst_34 = arith.constant dense<0.000000e+00> : vector<8xf32>
    %90 = vector.multi_reduction <add>, %89, %cst_34 [1] : vector<8x256xf32> to vector<8xf32>
    %91 = vector.shape_cast %90 : vector<8xf32> to vector<8x1xf32>
    %92 = arith.addf %57, %91 : vector<8x1xf32>
    %93 = vector.extract_strided_slice %0 {offsets = [0, 512], sizes = [8, 256], strides = [1, 1]} : vector<8x768xbf16> to vector<8x256xbf16>
    %94 = arith.extf %93 : vector<8x256xbf16> to vector<8x256xf32>
    %cst_35 = arith.constant dense<0.000000e+00> : vector<8xf32>
    %95 = vector.multi_reduction <add>, %94, %cst_35 [1] : vector<8x256xf32> to vector<8xf32>
    %96 = vector.shape_cast %95 : vector<8xf32> to vector<8x1xf32>
    %97 = arith.mulf %94, %94 : vector<8x256xf32>
    %cst_36 = arith.constant dense<0.000000e+00> : vector<8xf32>
    %98 = vector.multi_reduction <add>, %97, %cst_36 [1] : vector<8x256xf32> to vector<8xf32>
    %99 = vector.shape_cast %98 : vector<8xf32> to vector<8x1xf32>
    %cst_37 = arith.constant 3.906250e-03 : f32
    %100 = vector.broadcast %cst_37 : f32 to vector<8x1xf32>
    %101 = arith.mulf %96, %100 : vector<8x1xf32>
    %cst_38 = arith.constant 2.560000e+02 : f32
    %102 = vector.broadcast %cst_38 : f32 to vector<8x1xf32>
    %103 = arith.mulf %102, %101 : vector<8x1xf32>
    %104 = arith.mulf %103, %101 : vector<8x1xf32>
    %105 = arith.subf %99, %104 : vector<8x1xf32>
    %cst_39 = arith.constant 0.00392156886 : f32
    %106 = vector.broadcast %cst_39 : f32 to vector<8x1xf32>
    %107 = arith.mulf %105, %106 : vector<8x1xf32>
    %cst_40 = arith.constant 0.000000e+00 : f32
    %108 = vector.broadcast %cst_40 : f32 to vector<8x1xf32>
    %109 = arith.maximumf %107, %108 : vector<8x1xf32>
    %110 = math.sqrt %109 : vector<8x1xf32>
    %cst_41 = arith.constant 2.250000e-01 : f32
    %111 = vector.broadcast %cst_41 : f32 to vector<8x1xf32>
    %112 = arith.mulf %111, %110 : vector<8x1xf32>
    %cst_42 = arith.constant 9.99999997E-7 : f32
    %113 = vector.broadcast %cst_42 : f32 to vector<8x1xf32>
    %114 = arith.addf %112, %113 : vector<8x1xf32>
    %115 = tpu.reciprocal %114 {approx = true} : vector<8x1xf32> -> vector<8x1xf32>
    %cst_43 = arith.constant 2.250000e-01 : f32
    %116 = vector.broadcast %cst_43 : f32 to vector<8x1xf32>
    %117 = arith.mulf %116, %115 : vector<8x1xf32>
    %118 = vector.broadcast %101 : vector<8x1xf32> to vector<8x256xf32>
    %119 = arith.subf %94, %118 : vector<8x256xf32>
    %120 = vector.broadcast %117 : vector<8x1xf32> to vector<8x256xf32>
    %121 = arith.mulf %119, %120 : vector<8x256xf32>
    %122 = vector.extract_strided_slice %21 {offsets = [0, 512], sizes = [8, 256], strides = [1, 1]} : vector<8x768xf32> to vector<8x256xf32>
    %123 = arith.subf %122, %121 : vector<8x256xf32>
    %124 = arith.mulf %123, %123 : vector<8x256xf32>
    %cst_44 = arith.constant dense<0.000000e+00> : vector<8xf32>
    %125 = vector.multi_reduction <add>, %124, %cst_44 [1] : vector<8x256xf32> to vector<8xf32>
    %126 = vector.shape_cast %125 : vector<8xf32> to vector<8x1xf32>
    %127 = arith.addf %92, %126 : vector<8x1xf32>
    %cst_45 = arith.constant 0.000000e+00 : f32
    %128 = vector.broadcast %cst_45 : f32 to vector<8x1xf32>
    %129 = arith.select %10, %127, %128 : vector<8x1xi1>, vector<8x1xf32>
    %cst_46 = arith.constant dense<0.000000e+00> : vector<1xf32>
    %130 = vector.multi_reduction <add>, %129, %cst_46 [0] : vector<8x1xf32> to vector<1xf32>
    %131 = vector.shape_cast %130 : vector<1xf32> to vector<1x1xf32>
    %132 = vector.shape_cast %131 : vector<1x1xf32> to vector<1x1xf32>
    %133 = vector.broadcast %132 : vector<1x1xf32> to vector<1x128xf32>
    %c0_47 = arith.constant 0 : index
    %c0_48 = arith.constant 0 : index
    %134 = vector.load %arg7[%c0_47, %c0_48] : memref<1x128xf32, #tpu.memory_space<vmem>>, vector<1x128xf32>
    tpu.vector_store %arg7[%c0_47, %c0_48], %133 {strides = array<i32>} : memref<1x128xf32, #tpu.memory_space<vmem>>, vector<1x128xf32>,
    return
  }
  func.func @transform_0(%arg0: i32) -> (i32, i32) {
    %c0_i32 = arith.constant 0 : i32
    %c0_i32_0 = arith.constant 0 : i32
    return %arg0, %c0_i32 : i32, i32
  }
  func.func @transform_1(%arg0: i32) -> (i32, i32) {
    %c0_i32 = arith.constant 0 : i32
    %c0_i32_0 = arith.constant 0 : i32
    return %arg0, %c0_i32 : i32, i32
  }
  func.func @transform_2(%arg0: i32) -> (i32, i32) {
    %c0_i32 = arith.constant 0 : i32
    %c0_i32_0 = arith.constant 0 : i32
    %c0_i32_1 = arith.constant 0 : i32
    return %c0_i32, %c0_i32_0 : i32, i32
  }
  func.func @transform_3(%arg0: i32) -> (i32, i32) {
    %c0_i32 = arith.constant 0 : i32
    %c0_i32_0 = arith.constant 0 : i32
    %c0_i32_1 = arith.constant 0 : i32
    return %c0_i32, %c0_i32_0 : i32, i32
  }
  func.func @transform_4(%arg0: i32) -> (i32, i32) {
    %c0_i32 = arith.constant 0 : i32
    %c0_i32_0 = arith.constant 0 : i32
    %c0_i32_1 = arith.constant 0 : i32
    return %c0_i32, %c0_i32_0 : i32, i32
  }
  func.func @transform_5(%arg0: i32) -> (i32, i32) {
    %c0_i32 = arith.constant 0 : i32
    %c0_i32_0 = arith.constant 0 : i32
    %c0_i32_1 = arith.constant 0 : i32
    return %c0_i32, %c0_i32_0 : i32, i32
  }
  func.func @transform_6(%arg0: i32) -> (i32, i32) {
    %c0_i32 = arith.constant 0 : i32
    %c0_i32_0 = arith.constant 0 : i32
    return %arg0, %c0_i32 : i32, i32
  }
}

</mosaic_0001>

<llo_original>
// kernel: tpu_custom_call.1
$region0: #{tpu_custom_call.1}
  #allocation0 [shape = 'u32[]', space=smem, size = 0x4, offset = 0x4, fixed_abs, tag = 'smem constant byte address 0x4 - core index']
  #allocation1 [shape = 'u32[72,128]{1,0:T(1,128)}', space=vmem, size = 0x9000, scoped, tag = 'internal scratch']
  %s0 = inlined_call_operand.hbm [shape: bf16[8,768], index: 0, kind: input, shape index: {}]
  %s1 = inlined_call_operand.vmem [shape: f32[8,1], index: 1, kind: input, shape index: {}]
  %s2 = inlined_call_operand.hbm [shape: bf16[768,128], index: 2, kind: input, shape index: {}]
  %s3 = inlined_call_operand.vmem [shape: f32[1,128], index: 3, kind: input, shape index: {}]
  %s4 = inlined_call_operand.hbm [shape: bf16[128,768], index: 4, kind: input, shape index: {}]
  %s5 = inlined_call_operand.vmem [shape: f32[1,768], index: 5, kind: input, shape index: {}]
  %s6 = inlined_call_operand.hbm [shape: f32[1,128], index: 6, kind: output, shape index: {}]
  %s7 = sld [smem:[#allocation0]]
  $region46: #{tpu_custom_call.1} parent=0
    _
  %s9 = ssub.s32 1, %s7
  %s10 = scalar_select 0, %s9, %s7
  $region1: #{tpu_custom_call.1} parent=0
    #allocation2 [shape = 'u8[12288]{0}', space=vmem, size = 0x3000, scoped, tag = 'input window, operand 0, single buffered']
    #allocation3 [shape = 's32[1]{0}', space=sflag, size = 0x4, scoped, tag = 'scoped memory for tpu_custom_call.1']
    #allocation4 [shape = 's32[1]{0}', space=sflag, size = 0x4, scoped, tag = 'scoped memory for tpu_custom_call.1']
    #allocation5 [shape = 'u8[196608]{0}', space=vmem, size = 0x30000, scoped, tag = 'input window, operand 2, single buffered']
    #allocation6 [shape = 's32[1]{0}', space=sflag, size = 0x4, scoped, tag = 'scoped memory for tpu_custom_call.1']
    #allocation7 [shape = 'u8[196608]{0}', space=vmem, size = 0x30000, scoped, tag = 'input window, operand 4, single buffered']
    #allocation8 [shape = 'u8[512]{0}', space=vmem, size = 0x400, scoped, tag = 'output window, operand 0, single buffered']
    %11 = vsyncpa [#allocation3], 0
    %12 = vsyncpa [#allocation6], 0
    %13 = vsyncpa [#allocation4], 0
    // Predicated region
    $region2: #{tpu_custom_call.1} parent=1 // pred_check
      _
    $region3: #{tpu_custom_call.1} parent=1 // pred_check_branch
      %15 = sbr.rel (0) target = $region5
    $region4: #{tpu_custom_call.1} parent=1 // pred_region
      %17 = vsyncadd [#allocation3], 0
      %s19 = sshll.u32 %s0, 4
      %s20 = int_to_ptr.hbm [resolvable:$true] %s19
      %s21 = sshll.u32 [#allocation2], 4
      %s22 = int_to_ptr.vmem [resolvable:$true] %s21
      %24 = dma.hbm_to_vmem [thread:$0]  %s20, 384, %s22, [#allocation3]
    $region5: #{tpu_custom_call.1} parent=1 // pred_fallthru
      _
    // Predicated region
    $region6: #{tpu_custom_call.1} parent=1 // pred_check
      _
    $region7: #{tpu_custom_call.1} parent=1 // pred_check_branch
      %26 = sbr.rel (0) target = $region9
    $region8: #{tpu_custom_call.1} parent=1 // pred_region
      _
    $region9: #{tpu_custom_call.1} parent=1 // pred_fallthru
      _
    // Predicated region
    $region10: #{tpu_custom_call.1} parent=1 // pred_check
      _
    $region11: #{tpu_custom_call.1} parent=1 // pred_check_branch
      %28 = sbr.rel (0) target = $region13
    $region12: #{tpu_custom_call.1} parent=1 // pred_region
      %30 = vsyncadd [#allocation6], 0
      %s31 = sshll.u32 %s2, 4
      %s32 = int_to_ptr.hbm [resolvable:$true] %s31
      %s33 = sshll.u32 [#allocation5], 4
      %s34 = int_to_ptr.vmem [resolvable:$true] %s33
      %39 = dma.hbm_to_vmem [thread:$0]  %s32, 6144, %s34, [#allocation6], 64, 64, 4
    $region13: #{tpu_custom_call.1} parent=1 // pred_fallthru
      _
    // Predicated region
    $region14: #{tpu_custom_call.1} parent=1 // pred_check
      _
    $region15: #{tpu_custom_call.1} parent=1 // pred_check_branch
      %41 = sbr.rel (0) target = $region17
    $region16: #{tpu_custom_call.1} parent=1 // pred_region
      _
    $region17: #{tpu_custom_call.1} parent=1 // pred_fallthru
      _
    // Predicated region
    $region18: #{tpu_custom_call.1} parent=1 // pred_check
      _
    $region19: #{tpu_custom_call.1} parent=1 // pred_check_branch
      %43 = sbr.rel (0) target = $region21
    $region20: #{tpu_custom_call.1} parent=1 // pred_region
      %45 = vsyncadd [#allocation6], 0
      %s46 = sshll.u32 %s4, 4
      %s47 = int_to_ptr.hbm [resolvable:$true] %s46
      %s48 = sshll.u32 [#allocation7], 4
      %s49 = int_to_ptr.vmem [resolvable:$true] %s48
      %54 = dma.hbm_to_vmem [thread:$0]  %s47, 6144, %s49, [#allocation6], 384, 384, 24
    $region21: #{tpu_custom_call.1} parent=1 // pred_fallthru
      _
    // Predicated region
    $region22: #{tpu_custom_call.1} parent=1 // pred_check
      _
    $region23: #{tpu_custom_call.1} parent=1 // pred_check_branch
      %56 = sbr.rel (0) target = $region25
    $region24: #{tpu_custom_call.1} parent=1 // pred_region
      _
    $region25: #{tpu_custom_call.1} parent=1 // pred_fallthru
      _
    // Predicated region
    $region26: #{tpu_custom_call.1} parent=1 // pred_check
      _
    $region27: #{tpu_custom_call.1} parent=1 // pred_check_branch
      %58 = sbr.rel (0) target = $region29
    $region28: #{tpu_custom_call.1} parent=1 // pred_region
      %60 = dma.done [#allocation3], 384
    $region29: #{tpu_custom_call.1} parent=1 // pred_fallthru
      _
    // Predicated region
    $region30: #{tpu_custom_call.1} parent=1 // pred_check
      _
    $region31: #{tpu_custom_call.1} parent=1 // pred_check_branch
      %62 = sbr.rel (0) target = $region33
    $region32: #{tpu_custom_call.1} parent=1 // pred_region
      %64 = dma.done [#allocation6], 6144
    $region33: #{tpu_custom_call.1} parent=1 // pred_fallthru
      _
    // Predicated region
    $region34: #{tpu_custom_call.1} parent=1 // pred_check
      _
    $region35: #{tpu_custom_call.1} parent=1 // pred_check_branch
      %66 = sbr.rel (0) target = $region37
    $region36: #{tpu_custom_call.1} parent=1 // pred_region
      %68 = dma.done [#allocation6], 6144
    $region37: #{tpu_custom_call.1} parent=1 // pred_fallthru
      _
    %v69 = vld [vmem:[#allocation2] sm:$0xff]
    %v70 = vld [vmem:[#allocation2 + $0x8] sm:$0xff]
    %v71 = vld [vmem:[#allocation2 + $0x10] sm:$0xff]
    %s72 = smul.u32 0, 8
    %v73 = vlaneseq
    %v74 = vshrl.u32 %v73, 7
    %v75 = vstv %s72
    %v76 = vadd.s32 %v75, %v74
    %vm77 = vcmp.lt.s32.totalorder %v76, 8
    %v78 = vld [vmem:[%s1] sm:$0xff]
    %vm79 = vcmp.gt.f32.partialorder %v78, 0.5
    %vm80 = vmand %vm77, %vm79
    %v81 = vld [vmem:[#allocation5] sm:$0xf]
    %v82 = vld [vmem:[#allocation5 + $0x4] sm:$0xf]
    %v83 = vld [vmem:[#allocation5 + $0x8] sm:$0xf]
    %v84 = vld [vmem:[#allocation5 + $0xc] sm:$0xf]
    %v85 = vld [vmem:[#allocation5 + $0x10] sm:$0xf]
    %v86 = vld [vmem:[#allocation5 + $0x14] sm:$0xf]
    %v87 = vld [vmem:[#allocation5 + $0x18] sm:$0xf]
    %v88 = vld [vmem:[#allocation5 + $0x1c] sm:$0xf]
    %v89 = vld [vmem:[#allocation5 + $0x20] sm:$0xf]
    %v90 = vld [vmem:[#allocation5 + $0x24] sm:$0xf]
    %v91 = vld [vmem:[#allocation5 + $0x28] sm:$0xf]
    %v92 = vld [vmem:[#allocation5 + $0x2c] sm:$0xf]
    %v93 = vld [vmem:[#allocation5 + $0x30] sm:$0xf]
    %v94 = vld [vmem:[#allocation5 + $0x34] sm:$0xf]
    %v95 = vld [vmem:[#allocation5 + $0x38] sm:$0xf]
    %v96 = vld [vmem:[#allocation5 + $0x3c] sm:$0xf]
    %v97 = vld [vmem:[#allocation5 + $0x40] sm:$0xf]
    %v98 = vld [vmem:[#allocation5 + $0x44] sm:$0xf]
    %v99 = vld [vmem:[#allocation5 + $0x48] sm:$0xf]
    %v100 = vld [vmem:[#allocation5 + $0x4c] sm:$0xf]
    %v101 = vld [vmem:[#allocation5 + $0x50] sm:$0xf]
    %v102 = vld [vmem:[#allocation5 + $0x54] sm:$0xf]
    %v103 = vld [vmem:[#allocation5 + $0x58] sm:$0xf]
    %v104 = vld [vmem:[#allocation5 + $0x5c] sm:$0xf]
    %v105 = vld [vmem:[#allocation5 + $0x60] sm:$0xf]
    %v106 = vld [vmem:[#allocation5 + $0x64] sm:$0xf]
    %v107 = vld [vmem:[#allocation5 + $0x68] sm:$0xf]
    %v108 = vld [vmem:[#allocation5 + $0x6c] sm:$0xf]
    %v109 = vld [vmem:[#allocation5 + $0x70] sm:$0xf]
    %v110 = vld [vmem:[#allocation5 + $0x74] sm:$0xf]
    %v111 = vld [vmem:[#allocation5 + $0x78] sm:$0xf]
    %v112 = vld [vmem:[#allocation5 + $0x7c] sm:$0xf]
    %v113 = vld [vmem:[#allocation5 + $0x80] sm:$0xf]
    %v114 = vld [vmem:[#allocation5 + $0x84] sm:$0xf]
    %v115 = vld [vmem:[#allocation5 + $0x88] sm:$0xf]
    %v116 = vld [vmem:[#allocation5 + $0x8c] sm:$0xf]
    %v117 = vld [vmem:[#allocation5 + $0x90] sm:$0xf]
    %v118 = vld [vmem:[#allocation5 + $0x94] sm:$0xf]
    %v119 = vld [vmem:[#allocation5 + $0x98] sm:$0xf]
    %v120 = vld [vmem:[#allocation5 + $0x9c] sm:$0xf]
    %v121 = vld [vmem:[#allocation5 + $0xa0] sm:$0xf]
    %v122 = vld [vmem:[#allocation5 + $0xa4] sm:$0xf]
    %v123 = vld [vmem:[#allocation5 + $0xa8] sm:$0xf]
    %v124 = vld [vmem:[#allocation5 + $0xac] sm:$0xf]
    %v125 = vld [vmem:[#allocation5 + $0xb0] sm:$0xf]
    %v126 = vld [vmem:[#allocation5 + $0xb4] sm:$0xf]
    %v127 = vld [vmem:[#allocation5 + $0xb8] sm:$0xf]
    %v128 = vld [vmem:[#allocation5 + $0xbc] sm:$0xf]
    %v129 = vld [vmem:[#allocation5 + $0xc0] sm:$0xf]
    %v130 = vld [vmem:[#allocation5 + $0xc4] sm:$0xf]
    %v131 = vld [vmem:[#allocation5 + $0xc8] sm:$0xf]
    %v132 = vld [vmem:[#allocation5 + $0xcc] sm:$0xf]
    %v133 = vld [vmem:[#allocation5 + $0xd0] sm:$0xf]
    %v134 = vld [vmem:[#allocation5 + $0xd4] sm:$0xf]
    %v135 = vld [vmem:[#allocation5 + $0xd8] sm:$0xf]
    %v136 = vld [vmem:[#allocation5 + $0xdc] sm:$0xf]
    %v137 = vld [vmem:[#allocation5 + $0xe0] sm:$0xf]
    %v138 = vld [vmem:[#allocation5 + $0xe4] sm:$0xf]
    %v139 = vld [vmem:[#allocation5 + $0xe8] sm:$0xf]
    %v140 = vld [vmem:[#allocation5 + $0xec] sm:$0xf]
    %v141 = vld [vmem:[#allocation5 + $0xf0] sm:$0xf]
    %v142 = vld [vmem:[#allocation5 + $0xf4] sm:$0xf]
    %v143 = vld [vmem:[#allocation5 + $0xf8] sm:$0xf]
    %v144 = vld [vmem:[#allocation5 + $0xfc] sm:$0xf]
    %v145 = vld [vmem:[#allocation5 + $0x100] sm:$0xf]
    %v146 = vld [vmem:[#allocation5 + $0x104] sm:$0xf]
    %v147 = vld [vmem:[#allocation5 + $0x108] sm:$0xf]
    %v148 = vld [vmem:[#allocation5 + $0x10c] sm:$0xf]
    %v149 = vld [vmem:[#allocation5 + $0x110] sm:$0xf]
    %v150 = vld [vmem:[#allocation5 + $0x114] sm:$0xf]
    %v151 = vld [vmem:[#allocation5 + $0x118] sm:$0xf]
    %v152 = vld [vmem:[#allocation5 + $0x11c] sm:$0xf]
    %v153 = vld [vmem:[#allocation5 + $0x120] sm:$0xf]
    %v154 = vld [vmem:[#allocation5 + $0x124] sm:$0xf]
    %v155 = vld [vmem:[#allocation5 + $0x128] sm:$0xf]
    %v156 = vld [vmem:[#allocation5 + $0x12c] sm:$0xf]
    %v157 = vld [vmem:[#allocation5 + $0x130] sm:$0xf]
    %v158 = vld [vmem:[#allocation5 + $0x134] sm:$0xf]
    %v159 = vld [vmem:[#allocation5 + $0x138] sm:$0xf]
    %v160 = vld [vmem:[#allocation5 + $0x13c] sm:$0xf]
    %v161 = vld [vmem:[#allocation5 + $0x140] sm:$0xf]
    %v162 = vld [vmem:[#allocation5 + $0x144] sm:$0xf]
    %v163 = vld [vmem:[#allocation5 + $0x148] sm:$0xf]
    %v164 = vld [vmem:[#allocation5 + $0x14c] sm:$0xf]
    %v165 = vld [vmem:[#allocation5 + $0x150] sm:$0xf]
    %v166 = vld [vmem:[#allocation5 + $0x154] sm:$0xf]
    %v167 = vld [vmem:[#allocation5 + $0x158] sm:$0xf]
    %v168 = vld [vmem:[#allocation5 + $0x15c] sm:$0xf]
    %v169 = vld [vmem:[#allocation5 + $0x160] sm:$0xf]
    %v170 = vld [vmem:[#allocation5 + $0x164] sm:$0xf]
    %v171 = vld [vmem:[#allocation5 + $0x168] sm:$0xf]
    %v172 = vld [vmem:[#allocation5 + $0x16c] sm:$0xf]
    %v173 = vld [vmem:[#allocation5 + $0x170] sm:$0xf]
    %v174 = vld [vmem:[#allocation5 + $0x174] sm:$0xf]
    %v175 = vld [vmem:[#allocation5 + $0x178] sm:$0xf]
    %v176 = vld [vmem:[#allocation5 + $0x17c] sm:$0xf]
    %v177 = vld [vmem:[%s3] sm:$0x1]
    %v179 = vperm.slane %v177, 0
    %v184 = vunpack.c.l.b16 %v69
    %v185 = vunpack.c.h.b16 %v69
    %v186 = vunpack.c.l.b16 %v70
    %v187 = vunpack.c.h.b16 %v70
    %v188 = vunpack.c.l.b16 %v71
    %v189 = vunpack.c.h.b16 %v71
    %v190 = vpack.c.b16 %v184, %v184
    %v191 = vpack.c.b16 %v185, %v185
    %v192 = vpack.c.b16 %v186, %v186
    %v193 = vpack.c.b16 %v187, %v187
    %v194 = vpack.c.b16 %v188, %v188
    %v195 = vpack.c.b16 %v189, %v189
    %v298 = vunpack.c.l.b16 %v81
    %v299 = vunpack.c.l.b16 %v82
    %v300 = vunpack.c.l.b16 %v83
    %v301 = vunpack.c.l.b16 %v84
    %v302 = vunpack.c.l.b16 %v85
    %v303 = vunpack.c.l.b16 %v86
    %v304 = vunpack.c.l.b16 %v87
    %v305 = vunpack.c.l.b16 %v88
    %v306 = vunpack.c.l.b16 %v89
    %v307 = vunpack.c.l.b16 %v90
    %v308 = vunpack.c.l.b16 %v91
    %v309 = vunpack.c.l.b16 %v92
    %v310 = vunpack.c.l.b16 %v93
    %v311 = vunpack.c.l.b16 %v94
    %v312 = vunpack.c.l.b16 %v95
    %v313 = vunpack.c.l.b16 %v96
    %v314 = vunpack.c.l.b16 %v97
    %v315 = vunpack.c.l.b16 %v98
    %v316 = vunpack.c.l.b16 %v99
    %v317 = vunpack.c.l.b16 %v100
    %v318 = vunpack.c.l.b16 %v101
    %v319 = vunpack.c.l.b16 %v102
    %v320 = vunpack.c.l.b16 %v103
    %v321 = vunpack.c.l.b16 %v104
    %v322 = vunpack.c.l.b16 %v105
    %v323 = vunpack.c.l.b16 %v106
    %v324 = vunpack.c.l.b16 %v107
    %v325 = vunpack.c.l.b16 %v108
    %v326 = vunpack.c.l.b16 %v109
    %v327 = vunpack.c.l.b16 %v110
    %v328 = vunpack.c.l.b16 %v111
    %v329 = vunpack.c.l.b16 %v112
    %v330 = vunpack.c.l.b16 %v113
    %v331 = vunpack.c.l.b16 %v114
    %v332 = vunpack.c.l.b16 %v115
    %v333 = vunpack.c.l.b16 %v116
    %v334 = vunpack.c.l.b16 %v117
    %v335 = vunpack.c.l.b16 %v118
    %v336 = vunpack.c.l.b16 %v119
    %v337 = vunpack.c.l.b16 %v120
    %v338 = vunpack.c.l.b16 %v121
    %v339 = vunpack.c.l.b16 %v122
    %v340 = vunpack.c.l.b16 %v123
    %v341 = vunpack.c.l.b16 %v124
    %v342 = vunpack.c.l.b16 %v125
    %v343 = vunpack.c.l.b16 %v126
    %v344 = vunpack.c.l.b16 %v127
    %v345 = vunpack.c.l.b16 %v128
    %v346 = vunpack.c.l.b16 %v129
    %v347 = vunpack.c.l.b16 %v130
    %v348 = vunpack.c.l.b16 %v131
    %v349 = vunpack.c.l.b16 %v132
    %v350 = vunpack.c.l.b16 %v133
    %v351 = vunpack.c.l.b16 %v134
    %v352 = vunpack.c.l.b16 %v135
    %v353 = vunpack.c.l.b16 %v136
    %v354 = vunpack.c.l.b16 %v137
    %v355 = vunpack.c.l.b16 %v138
    %v356 = vunpack.c.l.b16 %v139
    %v357 = vunpack.c.l.b16 %v140
    %v358 = vunpack.c.l.b16 %v141
    %v359 = vunpack.c.l.b16 %v142
    %v360 = vunpack.c.l.b16 %v143
    %v361 = vunpack.c.l.b16 %v144
    %v362 = vunpack.c.l.b16 %v145
    %v363 = vunpack.c.l.b16 %v146
    %v364 = vunpack.c.l.b16 %v147
    %v365 = vunpack.c.l.b16 %v148
    %v366 = vunpack.c.l.b16 %v149
    %v367 = vunpack.c.l.b16 %v150
    %v368 = vunpack.c.l.b16 %v151
    %v369 = vunpack.c.l.b16 %v152
    %v370 = vunpack.c.l.b16 %v153
    %v371 = vunpack.c.l.b16 %v154
    %v372 = vunpack.c.l.b16 %v155
    %v373 = vunpack.c.l.b16 %v156
    %v374 = vunpack.c.l.b16 %v157
    %v375 = vunpack.c.l.b16 %v158
    %v376 = vunpack.c.l.b16 %v159
    %v377 = vunpack.c.l.b16 %v160
    %v378 = vunpack.c.l.b16 %v161
    %v379 = vunpack.c.l.b16 %v162
    %v380 = vunpack.c.l.b16 %v163
    %v381 = vunpack.c.l.b16 %v164
    %v382 = vunpack.c.l.b16 %v165
    %v383 = vunpack.c.l.b16 %v166
    %v384 = vunpack.c.l.b16 %v167
    %v385 = vunpack.c.l.b16 %v168
    %v386 = vunpack.c.l.b16 %v169
    %v387 = vunpack.c.l.b16 %v170
    %v388 = vunpack.c.l.b16 %v171
    %v389 = vunpack.c.l.b16 %v172
    %v390 = vunpack.c.l.b16 %v173
    %v391 = vunpack.c.l.b16 %v174
    %v392 = vunpack.c.l.b16 %v175
    %v393 = vunpack.c.l.b16 %v176
    %v394 = vpack.c.b16 %v299, %v298
    %v395 = vpack.c.b16 %v301, %v300
    %v396 = vpack.c.b16 %v303, %v302
    %v397 = vpack.c.b16 %v305, %v304
    %v398 = vpack.c.b16 %v307, %v306
    %v399 = vpack.c.b16 %v309, %v308
    %v400 = vpack.c.b16 %v311, %v310
    %v401 = vpack.c.b16 %v313, %v312
    %v402 = vpack.c.b16 %v315, %v314
    %v403 = vpack.c.b16 %v317, %v316
    %v404 = vpack.c.b16 %v319, %v318
    %v405 = vpack.c.b16 %v321, %v320
    %v406 = vpack.c.b16 %v323, %v322
    %v407 = vpack.c.b16 %v325, %v324
    %v408 = vpack.c.b16 %v327, %v326
    %v409 = vpack.c.b16 %v329, %v328
    %v410 = vpack.c.b16 %v331, %v330
    %v411 = vpack.c.b16 %v333, %v332
    %v412 = vpack.c.b16 %v335, %v334
    %v413 = vpack.c.b16 %v337, %v336
    %v414 = vpack.c.b16 %v339, %v338
    %v415 = vpack.c.b16 %v341, %v340
    %v416 = vpack.c.b16 %v343, %v342
    %v417 = vpack.c.b16 %v345, %v344
    %v418 = vpack.c.b16 %v347, %v346
    %v419 = vpack.c.b16 %v349, %v348
    %v420 = vpack.c.b16 %v351, %v350
    %v421 = vpack.c.b16 %v353, %v352
    %v422 = vpack.c.b16 %v355, %v354
    %v423 = vpack.c.b16 %v357, %v356
    %v424 = vpack.c.b16 %v359, %v358
    %v425 = vpack.c.b16 %v361, %v360
    %v426 = vpack.c.b16 %v363, %v362
    %v427 = vpack.c.b16 %v365, %v364
    %v428 = vpack.c.b16 %v367, %v366
    %v429 = vpack.c.b16 %v369, %v368
    %v430 = vpack.c.b16 %v371, %v370
    %v431 = vpack.c.b16 %v373, %v372
    %v432 = vpack.c.b16 %v375, %v374
    %v433 = vpack.c.b16 %v377, %v376
    %v434 = vpack.c.b16 %v379, %v378
    %v435 = vpack.c.b16 %v381, %v380
    %v436 = vpack.c.b16 %v383, %v382
    %v437 = vpack.c.b16 %v385, %v384
    %v438 = vpack.c.b16 %v387, %v386
    %v439 = vpack.c.b16 %v389, %v388
    %v440 = vpack.c.b16 %v391, %v390
    %v441 = vpack.c.b16 %v393, %v392
    %490 = vmatpush.bf16.msra.mxu0 %v401
    %491 = vmatpush.bf16.msra.mxu0 %v400
    %492 = vmatpush.bf16.msra.mxu0 %v399
    %493 = vmatpush.bf16.msra.mxu0 %v398
    %494 = vmatpush.bf16.msra.mxu0 %v397
    %495 = vmatpush.bf16.msra.mxu0 %v396
    %496 = vmatpush.bf16.msra.mxu0 %v395
    %497 = vmatpush.bf16.msra.mxu0 %v394
    %498 = vmatmul.bf16.gmra.mxu0 %v190
    %v499 = vpop.f32.mrf.mxu0
    %v500 = vadd.f32 %v179, %v499
    %v501 = vpop.f32.mrf.mxu0
    %502 = vdwg.mxu0
    %503 = vmatpush.bf16.msra.mxu0 %v409
    %504 = vmatpush.bf16.msra.mxu0 %v408
    %505 = vmatpush.bf16.msra.mxu0 %v407
    %506 = vmatpush.bf16.msra.mxu0 %v406
    %507 = vmatpush.bf16.msra.mxu0 %v405
    %508 = vmatpush.bf16.msra.mxu0 %v404
    %509 = vmatpush.bf16.msra.mxu0 %v403
    %510 = vmatpush.bf16.msra.mxu0 %v402
    %511 = vmatmul.bf16.gmra.mxu0 %v191
    %v512 = vpop.f32.mrf.mxu0
    %v513 = vadd.f32 %v500, %v512
    %v514 = vpop.f32.mrf.mxu0
    %515 = vdwg.mxu0
    %516 = vmatpush.bf16.msra.mxu0 %v417
    %517 = vmatpush.bf16.msra.mxu0 %v416
    %518 = vmatpush.bf16.msra.mxu0 %v415
    %519 = vmatpush.bf16.msra.mxu0 %v414
    %520 = vmatpush.bf16.msra.mxu0 %v413
    %521 = vmatpush.bf16.msra.mxu0 %v412
    %522 = vmatpush.bf16.msra.mxu0 %v411
    %523 = vmatpush.bf16.msra.mxu0 %v410
    %524 = vmatmul.bf16.gmra.mxu0 %v192
    %v525 = vpop.f32.mrf.mxu0
    %v526 = vadd.f32 %v513, %v525
    %v527 = vpop.f32.mrf.mxu0
    %528 = vdwg.mxu0
    %529 = vmatpush.bf16.msra.mxu0 %v425
    %530 = vmatpush.bf16.msra.mxu0 %v424
    %531 = vmatpush.bf16.msra.mxu0 %v423
    %532 = vmatpush.bf16.msra.mxu0 %v422
    %533 = vmatpush.bf16.msra.mxu0 %v421
    %534 = vmatpush.bf16.msra.mxu0 %v420
    %535 = vmatpush.bf16.msra.mxu0 %v419
    %536 = vmatpush.bf16.msra.mxu0 %v418
    %537 = vmatmul.bf16.gmra.mxu0 %v193
    %v538 = vpop.f32.mrf.mxu0
    %v539 = vadd.f32 %v526, %v538
    %v540 = vpop.f32.mrf.mxu0
    %541 = vdwg.mxu0
    %542 = vmatpush.bf16.msra.mxu0 %v433
    %543 = vmatpush.bf16.msra.mxu0 %v432
    %544 = vmatpush.bf16.msra.mxu0 %v431
    %545 = vmatpush.bf16.msra.mxu0 %v430
    %546 = vmatpush.bf16.msra.mxu0 %v429
    %547 = vmatpush.bf16.msra.mxu0 %v428
    %548 = vmatpush.bf16.msra.mxu0 %v427
    %549 = vmatpush.bf16.msra.mxu0 %v426
    %550 = vmatmul.bf16.gmra.mxu0 %v194
    %v551 = vpop.f32.mrf.mxu0
    %v552 = vadd.f32 %v539, %v551
    %v553 = vpop.f32.mrf.mxu0
    %554 = vdwg.mxu0
    %555 = vmatpush.bf16.msra.mxu0 %v441
    %556 = vmatpush.bf16.msra.mxu0 %v440
    %557 = vmatpush.bf16.msra.mxu0 %v439
    %558 = vmatpush.bf16.msra.mxu0 %v438
    %559 = vmatpush.bf16.msra.mxu0 %v437
    %560 = vmatpush.bf16.msra.mxu0 %v436
    %561 = vmatpush.bf16.msra.mxu0 %v435
    %562 = vmatpush.bf16.msra.mxu0 %v434
    %563 = vmatmul.bf16.gmra.mxu0 %v195
    %v564 = vpop.f32.mrf.mxu0
    %v565 = vadd.f32 %v552, %v564
    %v566 = vpop.f32.mrf.mxu0
    %567 = vdwg.mxu0
    %v568 = vpack.c.bf16 %v565, %v565
    %v569 = vld [vmem:[#allocation7] sm:$0xff]
    %v570 = vld [vmem:[#allocation7 + $0x8] sm:$0xff]
    %v571 = vld [vmem:[#allocation7 + $0x10] sm:$0xff]
    %v572 = vld [vmem:[#allocation7 + $0x18] sm:$0xff]
    %v573 = vld [vmem:[#allocation7 + $0x20] sm:$0xff]
    %v574 = vld [vmem:[#allocation7 + $0x28] sm:$0xff]
    %v575 = vld [vmem:[#allocation7 + $0x30] sm:$0xff]
    %v576 = vld [vmem:[#allocation7 + $0x38] sm:$0xff]
    %v577 = vld [vmem:[#allocation7 + $0x40] sm:$0xff]
    %v578 = vld [vmem:[#allocation7 + $0x48] sm:$0xff]
    %v579 = vld [vmem:[#allocation7 + $0x50] sm:$0xff]
    %v580 = vld [vmem:[#allocation7 + $0x58] sm:$0xff]
    %v581 = vld [vmem:[#allocation7 + $0x60] sm:$0xff]
    %v582 = vld [vmem:[#allocation7 + $0x68] sm:$0xff]
    %v583 = vld [vmem:[#allocation7 + $0x70] sm:$0xff]
    %v584 = vld [vmem:[#allocation7 + $0x78] sm:$0xff]
    %v585 = vld [vmem:[#allocation7 + $0x80] sm:$0xff]
    %v586 = vld [vmem:[#allocation7 + $0x88] sm:$0xff]
    %v587 = vld [vmem:[#allocation7 + $0x90] sm:$0xff]
    %v588 = vld [vmem:[#allocation7 + $0x98] sm:$0xff]
    %v589 = vld [vmem:[#allocation7 + $0xa0] sm:$0xff]
    %v590 = vld [vmem:[#allocation7 + $0xa8] sm:$0xff]
    %v591 = vld [vmem:[#allocation7 + $0xb0] sm:$0xff]
    %v592 = vld [vmem:[#allocation7 + $0xb8] sm:$0xff]
    %v593 = vld [vmem:[#allocation7 + $0xc0] sm:$0xff]
    %v594 = vld [vmem:[#allocation7 + $0xc8] sm:$0xff]
    %v595 = vld [vmem:[#allocation7 + $0xd0] sm:$0xff]
    %v596 = vld [vmem:[#allocation7 + $0xd8] sm:$0xff]
    %v597 = vld [vmem:[#allocation7 + $0xe0] sm:$0xff]
    %v598 = vld [vmem:[#allocation7 + $0xe8] sm:$0xff]
    %v599 = vld [vmem:[#allocation7 + $0xf0] sm:$0xff]
    %v600 = vld [vmem:[#allocation7 + $0xf8] sm:$0xff]
    %v601 = vld [vmem:[#allocation7 + $0x100] sm:$0xff]
    %v602 = vld [vmem:[#allocation7 + $0x108] sm:$0xff]
    %v603 = vld [vmem:[#allocation7 + $0x110] sm:$0xff]
    %v604 = vld [vmem:[#allocation7 + $0x118] sm:$0xff]
    %v605 = vld [vmem:[#allocation7 + $0x120] sm:$0xff]
    %v606 = vld [vmem:[#allocation7 + $0x128] sm:$0xff]
    %v607 = vld [vmem:[#allocation7 + $0x130] sm:$0xff]
    %v608 = vld [vmem:[#allocation7 + $0x138] sm:$0xff]
    %v609 = vld [vmem:[#allocation7 + $0x140] sm:$0xff]
    %v610 = vld [vmem:[#allocation7 + $0x148] sm:$0xff]
    %v611 = vld [vmem:[#allocation7 + $0x150] sm:$0xff]
    %v612 = vld [vmem:[#allocation7 + $0x158] sm:$0xff]
    %v613 = vld [vmem:[#allocation7 + $0x160] sm:$0xff]
    %v614 = vld [vmem:[#allocation7 + $0x168] sm:$0xff]
    %v615 = vld [vmem:[#allocation7 + $0x170] sm:$0xff]
    %v616 = vld [vmem:[#allocation7 + $0x178] sm:$0xff]
    %v617 = vld [vmem:[%s5] sm:$0x3f]
    %v619 = vperm.slane %v617, 0
    %v620 = vperm.slane %v617, 1
    %v621 = vperm.slane %v617, 2
    %v622 = vperm.slane %v617, 3
    %v623 = vperm.slane %v617, 4
    %v624 = vperm.slane %v617, 5
    %v679 = vunpack.c.l.b16 %v569
    %v680 = vunpack.c.h.b16 %v569
    %v681 = vunpack.c.l.b16 %v570
    %v682 = vunpack.c.h.b16 %v570
    %v683 = vunpack.c.l.b16 %v571
    %v684 = vunpack.c.h.b16 %v571
    %v685 = vunpack.c.l.b16 %v572
    %v686 = vunpack.c.h.b16 %v572
    %v687 = vunpack.c.l.b16 %v573
    %v688 = vunpack.c.h.b16 %v573
    %v689 = vunpack.c.l.b16 %v574
    %v690 = vunpack.c.h.b16 %v574
    %v691 = vunpack.c.l.b16 %v575
    %v692 = vunpack.c.h.b16 %v575
    %v693 = vunpack.c.l.b16 %v576
    %v694 = vunpack.c.h.b16 %v576
    %v695 = vunpack.c.l.b16 %v577
    %v696 = vunpack.c.h.b16 %v577
    %v697 = vunpack.c.l.b16 %v578
    %v698 = vunpack.c.h.b16 %v578
    %v699 = vunpack.c.l.b16 %v579
    %v700 = vunpack.c.h.b16 %v579
    %v701 = vunpack.c.l.b16 %v580
    %v702 = vunpack.c.h.b16 %v580
    %v703 = vunpack.c.l.b16 %v581
    %v704 = vunpack.c.h.b16 %v581
    %v705 = vunpack.c.l.b16 %v582
    %v706 = vunpack.c.h.b16 %v582
    %v707 = vunpack.c.l.b16 %v583
    %v708 = vunpack.c.h.b16 %v583
    %v709 = vunpack.c.l.b16 %v584
    %v710 = vunpack.c.h.b16 %v584
    %v711 = vunpack.c.l.b16 %v585
    %v712 = vunpack.c.h.b16 %v585
    %v713 = vunpack.c.l.b16 %v586
    %v714 = vunpack.c.h.b16 %v586
    %v715 = vunpack.c.l.b16 %v587
    %v716 = vunpack.c.h.b16 %v587
    %v717 = vunpack.c.l.b16 %v588
    %v718 = vunpack.c.h.b16 %v588
    %v719 = vunpack.c.l.b16 %v589
    %v720 = vunpack.c.h.b16 %v589
    %v721 = vunpack.c.l.b16 %v590
    %v722 = vunpack.c.h.b16 %v590
    %v723 = vunpack.c.l.b16 %v591
    %v724 = vunpack.c.h.b16 %v591
    %v725 = vunpack.c.l.b16 %v592
    %v726 = vunpack.c.h.b16 %v592
    %v727 = vunpack.c.l.b16 %v593
    %v728 = vunpack.c.h.b16 %v593
    %v729 = vunpack.c.l.b16 %v594
    %v730 = vunpack.c.h.b16 %v594
    %v731 = vunpack.c.l.b16 %v595
    %v732 = vunpack.c.h.b16 %v595
    %v733 = vunpack.c.l.b16 %v596
    %v734 = vunpack.c.h.b16 %v596
    %v735 = vunpack.c.l.b16 %v597
    %v736 = vunpack.c.h.b16 %v597
    %v737 = vunpack.c.l.b16 %v598
    %v738 = vunpack.c.h.b16 %v598
    %v739 = vunpack.c.l.b16 %v599
    %v740 = vunpack.c.h.b16 %v599
    %v741 = vunpack.c.l.b16 %v600
    %v742 = vunpack.c.h.b16 %v600
    %v743 = vunpack.c.l.b16 %v601
    %v744 = vunpack.c.h.b16 %v601
    %v745 = vunpack.c.l.b16 %v602
    %v746 = vunpack.c.h.b16 %v602
    %v747 = vunpack.c.l.b16 %v603
    %v748 = vunpack.c.h.b16 %v603
    %v749 = vunpack.c.l.b16 %v604
    %v750 = vunpack.c.h.b16 %v604
    %v751 = vunpack.c.l.b16 %v605
    %v752 = vunpack.c.h.b16 %v605
    %v753 = vunpack.c.l.b16 %v606
    %v754 = vunpack.c.h.b16 %v606
    %v755 = vunpack.c.l.b16 %v607
    %v756 = vunpack.c.h.b16 %v607
    %v757 = vunpack.c.l.b16 %v608
    %v758 = vunpack.c.h.b16 %v608
    %v759 = vunpack.c.l.b16 %v609
    %v760 = vunpack.c.h.b16 %v609
    %v761 = vunpack.c.l.b16 %v610
    %v762 = vunpack.c.h.b16 %v610
    %v763 = vunpack.c.l.b16 %v611
    %v764 = vunpack.c.h.b16 %v611
    %v765 = vunpack.c.l.b16 %v612
    %v766 = vunpack.c.h.b16 %v612
    %v767 = vunpack.c.l.b16 %v613
    %v768 = vunpack.c.h.b16 %v613
    %v769 = vunpack.c.l.b16 %v614
    %v770 = vunpack.c.h.b16 %v614
    %v771 = vunpack.c.l.b16 %v615
    %v772 = vunpack.c.h.b16 %v615
    %v773 = vunpack.c.l.b16 %v616
    %v774 = vunpack.c.h.b16 %v616
    %v775 = vpack.c.b16 %v685, %v679
    %v776 = vpack.c.b16 %v686, %v680
    %v777 = vpack.c.b16 %v687, %v681
    %v778 = vpack.c.b16 %v688, %v682
    %v779 = vpack.c.b16 %v689, %v683
    %v780 = vpack.c.b16 %v690, %v684
    %v781 = vpack.c.b16 %v697, %v691
    %v782 = vpack.c.b16 %v698, %v692
    %v783 = vpack.c.b16 %v699, %v693
    %v784 = vpack.c.b16 %v700, %v694
    %v785 = vpack.c.b16 %v701, %v695
    %v786 = vpack.c.b16 %v702, %v696
    %v787 = vpack.c.b16 %v709, %v703
    %v788 = vpack.c.b16 %v710, %v704
    %v789 = vpack.c.b16 %v711, %v705
    %v790 = vpack.c.b16 %v712, %v706
    %v791 = vpack.c.b16 %v713, %v707
    %v792 = vpack.c.b16 %v714, %v708
    %v793 = vpack.c.b16 %v721, %v715
    %v794 = vpack.c.b16 %v722, %v716
    %v795 = vpack.c.b16 %v723, %v717
    %v796 = vpack.c.b16 %v724, %v718
    %v797 = vpack.c.b16 %v725, %v719
    %v798 = vpack.c.b16 %v726, %v720
    %v799 = vpack.c.b16 %v733, %v727
    %v800 = vpack.c.b16 %v734, %v728
    %v801 = vpack.c.b16 %v735, %v729
    %v802 = vpack.c.b16 %v736, %v730
    %v803 = vpack.c.b16 %v737, %v731
    %v804 = vpack.c.b16 %v738, %v732
    %v805 = vpack.c.b16 %v745, %v739
    %v806 = vpack.c.b16 %v746, %v740
    %v807 = vpack.c.b16 %v747, %v741
    %v808 = vpack.c.b16 %v748, %v742
    %v809 = vpack.c.b16 %v749, %v743
    %v810 = vpack.c.b16 %v750, %v744
    %v811 = vpack.c.b16 %v757, %v751
    %v812 = vpack.c.b16 %v758, %v752
    %v813 = vpack.c.b16 %v759, %v753
    %v814 = vpack.c.b16 %v760, %v754
    %v815 = vpack.c.b16 %v761, %v755
    %v816 = vpack.c.b16 %v762, %v756
    %v817 = vpack.c.b16 %v769, %v763
    %v818 = vpack.c.b16 %v770, %v764
    %v819 = vpack.c.b16 %v771, %v765
    %v820 = vpack.c.b16 %v772, %v766
    %v821 = vpack.c.b16 %v773, %v767
    %v822 = vpack.c.b16 %v774, %v768
    %871 = vmatpush.bf16.msra.mxu0 %v817
    %872 = vmatpush.bf16.msra.mxu0 %v811
    %873 = vmatpush.bf16.msra.mxu0 %v805
    %874 = vmatpush.bf16.msra.mxu0 %v799
    %875 = vmatpush.bf16.msra.mxu0 %v793
    %876 = vmatpush.bf16.msra.mxu0 %v787
    %877 = vmatpush.bf16.msra.mxu0 %v781
    %878 = vmatpush.bf16.msra.mxu0 %v775
    %879 = vmatmul.bf16.gmra.mxu0 %v568
    %v880 = vpop.f32.mrf.mxu0
    %v881 = vadd.f32 %v619, %v880
    %v882 = vpop.f32.mrf.mxu0
    %883 = vdwg.mxu0
    %884 = vmatpush.bf16.msra.mxu0 %v818
    %885 = vmatpush.bf16.msra.mxu0 %v812
    %886 = vmatpush.bf16.msra.mxu0 %v806
    %887 = vmatpush.bf16.msra.mxu0 %v800
    %888 = vmatpush.bf16.msra.mxu0 %v794
    %889 = vmatpush.bf16.msra.mxu0 %v788
    %890 = vmatpush.bf16.msra.mxu0 %v782
    %891 = vmatpush.bf16.msra.mxu0 %v776
    %892 = vmatmul.bf16.gmra.mxu0 %v568
    %v893 = vpop.f32.mrf.mxu0
    %v894 = vadd.f32 %v620, %v893
    %v895 = vpop.f32.mrf.mxu0
    %896 = vdwg.mxu0
    %897 = vmatpush.bf16.msra.mxu0 %v819
    %898 = vmatpush.bf16.msra.mxu0 %v813
    %899 = vmatpush.bf16.msra.mxu0 %v807
    %900 = vmatpush.bf16.msra.mxu0 %v801
    %901 = vmatpush.bf16.msra.mxu0 %v795
    %902 = vmatpush.bf16.msra.mxu0 %v789
    %903 = vmatpush.bf16.msra.mxu0 %v783
    %904 = vmatpush.bf16.msra.mxu0 %v777
    %905 = vmatmul.bf16.gmra.mxu0 %v568
    %v906 = vpop.f32.mrf.mxu0
    %v907 = vadd.f32 %v621, %v906
    %v908 = vpop.f32.mrf.mxu0
    %909 = vdwg.mxu0
    %910 = vmatpush.bf16.msra.mxu0 %v820
    %911 = vmatpush.bf16.msra.mxu0 %v814
    %912 = vmatpush.bf16.msra.mxu0 %v808
    %913 = vmatpush.bf16.msra.mxu0 %v802
    %914 = vmatpush.bf16.msra.mxu0 %v796
    %915 = vmatpush.bf16.msra.mxu0 %v790
    %916 = vmatpush.bf16.msra.mxu0 %v784
    %917 = vmatpush.bf16.msra.mxu0 %v778
    %918 = vmatmul.bf16.gmra.mxu0 %v568
    %v919 = vpop.f32.mrf.mxu0
    %v920 = vadd.f32 %v622, %v919
    %v921 = vpop.f32.mrf.mxu0
    %922 = vdwg.mxu0
    %923 = vmatpush.bf16.msra.mxu0 %v821
    %924 = vmatpush.bf16.msra.mxu0 %v815
    %925 = vmatpush.bf16.msra.mxu0 %v809
    %926 = vmatpush.bf16.msra.mxu0 %v803
    %927 = vmatpush.bf16.msra.mxu0 %v797
    %928 = vmatpush.bf16.msra.mxu0 %v791
    %929 = vmatpush.bf16.msra.mxu0 %v785
    %930 = vmatpush.bf16.msra.mxu0 %v779
    %931 = vmatmul.bf16.gmra.mxu0 %v568
    %v932 = vpop.f32.mrf.mxu0
    %v933 = vadd.f32 %v623, %v932
    %v934 = vpop.f32.mrf.mxu0
    %935 = vdwg.mxu0
    %936 = vmatpush.bf16.msra.mxu0 %v822
    %937 = vmatpush.bf16.msra.mxu0 %v816
    %938 = vmatpush.bf16.msra.mxu0 %v810
    %939 = vmatpush.bf16.msra.mxu0 %v804
    %940 = vmatpush.bf16.msra.mxu0 %v798
    %941 = vmatpush.bf16.msra.mxu0 %v792
    %942 = vmatpush.bf16.msra.mxu0 %v786
    %943 = vmatpush.bf16.msra.mxu0 %v780
    %944 = vmatmul.bf16.gmra.mxu0 %v568
    %v945 = vpop.f32.mrf.mxu0
    %v946 = vadd.f32 %v624, %v945
    %v947 = vpop.f32.mrf.mxu0
    %948 = vdwg.mxu0
    %v949 = vunpack.c.l.bf16 %v69
    %v950 = vunpack.c.h.bf16 %v69
    %v951 = vadd.f32 %v949, %v950
    %952 = vadd.xlane.f32.xlu0 %v951
    %v953 = vpop.xlane.xlu0 %952
    %v954 = vmul.f32 %v949, %v949
    %v955 = vmul.f32 %v950, %v950
    %v956 = vadd.f32 %v954, %v955
    %957 = vadd.xlane.f32.xlu0 %v956
    %v958 = vpop.xlane.xlu0 %957
    %v959 = vmul.f32 %v953, 0.00390625
    %v960 = vmul.f32 %v959, 256.0
    %v961 = vmul.f32 %v960, %v959
    %v962 = vsub.f32 %v958, %v961
    %v963 = vmul.f32 %v962, 0.003921569
    %v964 = vmax.f32 %v963, 0.0
    %v965 = vrsqrt.pop %v964
    %v966 = vmul.f32 %v965, %v964
    %v967 = vmul.f32 %v966, %v965
    %v968 = vmul.f32 0.5, %v967
    %v969 = vsub.f32 1.5, %v968
    %v970 = vmul.f32 %v965, %v969
    %v971 = vmul.f32 %v964, %v970
    %vm972 = vcmp.eq.f32.partialorder %v964, inf
    %v973 = vsel %vm972, %v964, %v971
    %vm974 = vcmp.eq.f32.partialorder %v964, 0.0
    %v975 = vand.u32 %v964, 2147483648
    %v976 = vsel %vm974, %v975, %v973
    %v977 = vmul.f32 %v976, 0.229
    %v978 = vadd.f32 %v977, 1e-06
    %v979 = vrcp.pop %v978
    %v980 = vmul.f32 %v979, 0.229
    %v981 = vsub.f32 %v949, %v959
    %v982 = vsub.f32 %v950, %v959
    %v983 = vmul.f32 %v981, %v980
    %v984 = vmul.f32 %v982, %v980
    %v985 = vsub.f32 %v881, %v983
    %v986 = vsub.f32 %v894, %v984
    %v987 = vmul.f32 %v985, %v985
    %v988 = vmul.f32 %v986, %v986
    %v989 = vadd.f32 %v987, %v988
    %990 = vadd.xlane.f32.xlu0 %v989
    %v991 = vpop.xlane.xlu0 %990
    %v992 = vadd.f32 %v991, 0.0
    %v993 = vunpack.c.l.bf16 %v70
    %v994 = vunpack.c.h.bf16 %v70
    %v995 = vadd.f32 %v993, %v994
    %996 = vadd.xlane.f32.xlu0 %v995
    %v997 = vpop.xlane.xlu0 %996
    %v998 = vmul.f32 %v993, %v993
    %v999 = vmul.f32 %v994, %v994
    %v1000 = vadd.f32 %v998, %v999
    %1001 = vadd.xlane.f32.xlu0 %v1000
    %v1002 = vpop.xlane.xlu0 %1001
    %v1003 = vmul.f32 %v997, 0.00390625
    %v1004 = vmul.f32 %v1003, 256.0
    %v1005 = vmul.f32 %v1004, %v1003
    %v1006 = vsub.f32 %v1002, %v1005
    %v1007 = vmul.f32 %v1006, 0.003921569
    %v1008 = vmax.f32 %v1007, 0.0
    %v1009 = vrsqrt.pop %v1008
    %v1010 = vmul.f32 %v1009, %v1008
    %v1011 = vmul.f32 %v1010, %v1009
    %v1012 = vmul.f32 0.5, %v1011
    %v1013 = vsub.f32 1.5, %v1012
    %v1014 = vmul.f32 %v1009, %v1013
    %v1015 = vmul.f32 %v1008, %v1014
    %vm1016 = vcmp.eq.f32.partialorder %v1008, inf
    %v1017 = vsel %vm1016, %v1008, %v1015
    %vm1018 = vcmp.eq.f32.partialorder %v1008, 0.0
    %v1019 = vand.u32 %v1008, 2147483648
    %v1020 = vsel %vm1018, %v1019, %v1017
    %v1021 = vmul.f32 %v1020, 0.224
    %v1022 = vadd.f32 %v1021, 1e-06
    %v1023 = vrcp.pop %v1022
    %v1024 = vmul.f32 %v1023, 0.224
    %v1025 = vsub.f32 %v993, %v1003
    %v1026 = vsub.f32 %v994, %v1003
    %v1027 = vmul.f32 %v1025, %v1024
    %v1028 = vmul.f32 %v1026, %v1024
    %v1029 = vsub.f32 %v907, %v1027
    %v1030 = vsub.f32 %v920, %v1028
    %v1031 = vmul.f32 %v1029, %v1029
    %v1032 = vmul.f32 %v1030, %v1030
    %v1033 = vadd.f32 %v1031, %v1032
    %1034 = vadd.xlane.f32.xlu0 %v1033
    %v1035 = vpop.xlane.xlu0 %1034
    %v1036 = vadd.f32 %v992, %v1035
    %v1037 = vunpack.c.l.bf16 %v71
    %v1038 = vunpack.c.h.bf16 %v71
    %v1039 = vadd.f32 %v1037, %v1038
    %1040 = vadd.xlane.f32.xlu0 %v1039
    %v1041 = vpop.xlane.xlu0 %1040
    %v1042 = vmul.f32 %v1037, %v1037
    %v1043 = vmul.f32 %v1038, %v1038
    %v1044 = vadd.f32 %v1042, %v1043
    %1045 = vadd.xlane.f32.xlu0 %v1044
    %v1046 = vpop.xlane.xlu0 %1045
    %v1047 = vmul.f32 %v1041, 0.00390625
    %v1048 = vmul.f32 %v1047, 256.0
    %v1049 = vmul.f32 %v1048, %v1047
    %v1050 = vsub.f32 %v1046, %v1049
    %v1051 = vmul.f32 %v1050, 0.003921569
    %v1052 = vmax.f32 %v1051, 0.0
    %v1053 = vrsqrt.pop %v1052
    %v1054 = vmul.f32 %v1053, %v1052
    %v1055 = vmul.f32 %v1054, %v1053
    %v1056 = vmul.f32 0.5, %v1055
    %v1057 = vsub.f32 1.5, %v1056
    %v1058 = vmul.f32 %v1053, %v1057
    %v1059 = vmul.f32 %v1052, %v1058
    %vm1060 = vcmp.eq.f32.partialorder %v1052, inf
    %v1061 = vsel %vm1060, %v1052, %v1059
    %vm1062 = vcmp.eq.f32.partialorder %v1052, 0.0
    %v1063 = vand.u32 %v1052, 2147483648
    %v1064 = vsel %vm1062, %v1063, %v1061
    %v1065 = vmul.f32 %v1064, 0.225
    %v1066 = vadd.f32 %v1065, 1e-06
    %v1067 = vrcp.pop %v1066
    %v1068 = vmul.f32 %v1067, 0.225
    %v1069 = vsub.f32 %v1037, %v1047
    %v1070 = vsub.f32 %v1038, %v1047
    %v1071 = vmul.f32 %v1069, %v1068
    %v1072 = vmul.f32 %v1070, %v1068
    %v1073 = vsub.f32 %v933, %v1071
    %v1074 = vsub.f32 %v946, %v1072
    %v1075 = vmul.f32 %v1073, %v1073
    %v1076 = vmul.f32 %v1074, %v1074
    %v1077 = vadd.f32 %v1075, %v1076
    %1078 = vadd.xlane.f32.xlu0 %v1077
    %v1079 = vpop.xlane.xlu0 %1078
    %v1080 = vadd.f32 %v1036, %v1079
    %v1081 = vsel %vm80, %v1080, 0.0
    %vm1082 = vcmask 7168
    %v1083 = vsel %vm1082, %v1081, 0.0
    %v1084 = vrot.slane %v1083, 4
    %v1085 = vadd.f32 %v1083, %v1084
    %v1086 = vrot.slane %v1085, 2
    %v1087 = vadd.f32 %v1085, %v1086
    %v1088 = vrot.slane %v1087, 1
    %v1089 = vadd.f32 %v1087, %v1088
    %1091 = vset.pattern.permute.xlu0 0
    %1092 = vperm.xlu0 %1091, %v1089
    %v1093 = vpop.permute.xlu0 %1092
    %1095 = vst [vmem:[#allocation8] sm:$0x1] %v1093
    // Predicated region
    $region38: #{tpu_custom_call.1} parent=1 // pred_check
      _
    $region39: #{tpu_custom_call.1} parent=1 // pred_check_branch
      %1097 = sbr.rel (0) target = $region41
    $region40: #{tpu_custom_call.1} parent=1 // pred_region
      %1099 = vsyncadd [#allocation4], 0
      %s1101 = sshll.u32 [#allocation8], 4
      %s1102 = int_to_ptr.vmem [resolvable:$true] %s1101
      %s1103 = sshll.u32 %s6, 4
      %s1104 = int_to_ptr.hbm [resolvable:$true] %s1103
      %1106 = dma.vmem_to_hbm [thread:$0]  %s1102, 16, %s1104, [#allocation4]
    $region41: #{tpu_custom_call.1} parent=1 // pred_fallthru
      _
    // Predicated region
    $region42: #{tpu_custom_call.1} parent=1 // pred_check
      _
    $region43: #{tpu_custom_call.1} parent=1 // pred_check_branch
      %1108 = sbr.rel (0) target = $region45
    $region44: #{tpu_custom_call.1} parent=1 // pred_region
      %1110 = dma.done [#allocation4], 16
    $region45: #{tpu_custom_call.1} parent=1 // pred_fallthru
      _
    %1111 = vsyncpa [#allocation3], 1
    %1112 = vsyncpa [#allocation6], 1
    %1113 = vsyncpa [#allocation4], 1

</llo_original>
